<compile_context>
chip_gen: v7x
topology: tpu7x:2x2x1
jax: 0.10.0
libtpu: 0.0.40
codegen_flags: <defaults>
</compile_context>

<pallas_src>
import functools

import jax
import jax.numpy as jnp
from jax.experimental import pallas as pl
from jax.experimental.pallas import tpu as pltpu

EPS = 1e-6


def _round_up(a, b):
    return (a + b - 1) // b * b


def _layernorm_rowwise_kernel(x_ref, g_ref, b_ref, o_ref):
    """LayerNorm over the last axis; tile is (TR, D) with D == d_model (>=128)."""
    x = x_ref[...].astype(jnp.float32)
    d = x.shape[-1]
    mean = jnp.mean(x, axis=-1, keepdims=True)
    xc = x - mean
    var = jnp.sum(xc * xc, axis=-1, keepdims=True) * (1.0 / (d - 1))  # unbiased
    inv = jax.lax.rsqrt(var + EPS)
    y = g_ref[...].astype(jnp.float32) * (xc * inv) + b_ref[...].astype(jnp.float32)
    o_ref[...] = y.astype(o_ref.dtype)


def _layernorm_folded_kernel(x_ref, g_ref, b_ref, o_ref, *, d, k):
    """Lane-dense LayerNorm: k rows of width d folded into one F = k*d row.

    Each 128-lane row of the tile holds k independent d_model-wide rows; the
    per-segment mean/variance are computed with static lane slices (RoPE-style
    slice + concatenate), all in f32 on the VPU, then a single full-width store.
    """
    x = x_ref[...].astype(jnp.float32)                      # (TR, F)
    g = g_ref[...].astype(jnp.float32)                      # (1, F)
    b = b_ref[...].astype(jnp.float32)                      # (1, F)
    segs = []
    for s in range(k):
        xs = x[:, s * d:(s + 1) * d]                        # (TR, d)
        mean = jnp.mean(xs, axis=-1, keepdims=True)
        xc = xs - mean
        var = jnp.sum(xc * xc, axis=-1, keepdims=True) * (1.0 / (d - 1))
        inv = jax.lax.rsqrt(var + EPS)
        segs.append(xc * inv)
    y = jnp.concatenate(segs, axis=-1) * g + b              # (TR, F), lane-dense
    o_ref[...] = y.astype(o_ref.dtype)


def _choose_tile_rows(rows_f, row_bytes):
    """Pick a row tile: large enough to hide per-grid-step overhead, small
    enough that double-buffered in+out tiles stay within ~32 MiB of VMEM, and
    leaving >= ~8 grid steps for pipeline overlap / v7x megacore sharding."""
    vmem_tile_budget = 32 * 1024 * 1024               # 4 buffers (in+out, x2)
    by_vmem = max(8, (vmem_tile_budget // (4 * row_bytes)) // 8 * 8)
    by_grid = max(8, _round_up(pl.cdiv(rows_f, 8), 8))
    return int(min(512, by_vmem, by_grid))


def layer_norm_pallas(x, gamma, beta):
    """LayerNorm over the last axis (PyTorch-style: unbiased std, eps on variance)."""
    orig_shape = x.shape
    d = int(orig_shape[-1])
    assert d >= 2, "unbiased std (divide by d-1) requires d_model >= 2"
    dtype = x.dtype

    x2 = x.reshape(-1, d)
    rows = x2.shape[0]

    # Lane-dense folding: pack k rows into the 128-lane axis when d < 128.
    k = 128 // d if (d < 128 and 128 % d == 0) else 1
    f = k * d

    rows_k = _round_up(rows, k)
    if rows_k != rows:
        x2 = jnp.pad(x2, ((0, rows_k - rows), (0, 0)))
    rows_f = rows_k // k
    xf = x2.reshape(rows_f, f)

    itemsize = jnp.dtype(dtype).itemsize
    tile_rows = _choose_tile_rows(rows_f, f * itemsize)
    rows_pad = _round_up(rows_f, tile_rows)
    if rows_pad != rows_f:
        xf = jnp.pad(xf, ((0, rows_pad - rows_f), (0, 0)))
    grid = (rows_pad // tile_rows,)

    gamma_f = jnp.tile(gamma.reshape(-1).astype(jnp.float32), k).reshape(1, f)
    beta_f = jnp.tile(beta.reshape(-1).astype(jnp.float32), k).reshape(1, f)

    row_spec = pl.BlockSpec((tile_rows, f), lambda i: (i, 0))
    par_spec = pl.BlockSpec((1, f), lambda i: (0, 0))

    if k > 1:
        kernel = functools.partial(_layernorm_folded_kernel, d=d, k=k)
    else:
        kernel = _layernorm_rowwise_kernel

    out = pl.pallas_call(
        kernel,
        out_shape=jax.ShapeDtypeStruct((rows_pad, f), dtype),
        grid_spec=pltpu.PrefetchScalarGridSpec(
            num_scalar_prefetch=0,
            grid=grid,
            in_specs=[row_spec, par_spec, par_spec],
            out_specs=row_spec,
        ),
        compiler_params=pltpu.CompilerParams(
            dimension_semantics=("parallel",),
            vmem_limit_bytes=48 * 1024 * 1024,
        ),
    )(xf, gamma_f, beta_f)

    out = out[:rows_f].reshape(rows_k, d)[:rows]
    return out.reshape(orig_shape)


class Encoder:
    """JAX/Pallas port of TG_GGNN Encoder(layer, N)."""

    def __init__(self, size, N):
        self.size = size
        self.N = N
        # LayerNorm parameters (nn.Parameter(ones/zeros) init).
        self.a_2 = jnp.ones((size,), jnp.float32)
        self.b_2 = jnp.zeros((size,), jnp.float32)

    def __call__(self, x, mask):
        # TODO(synk): the injected `layer` module's forward is not defined in
        # the reference, so the N cloned layers are applied as identity; only
        # the Encoder-owned final LayerNorm runs (in the Pallas kernel).
        for _ in range(self.N):
            x = x  # placeholder for layer(x, mask)
        return layer_norm_pallas(x, self.a_2, self.b_2)


def _layernorm_reference(x, gamma, beta):
    mean = jnp.mean(x, axis=-1, keepdims=True)
    var_unbiased = jnp.var(x, axis=-1, keepdims=True, ddof=1)  # std(-1)**2
    return gamma * (x - mean) / jnp.sqrt(var_unbiased + EPS) + beta


if __name__ == "__main__":
    key = jax.random.PRNGKey(0)

    # Main test: d_model = 32 exercises the lane-dense folded path (k = 4).
    batch, seq, d_model, n_layers = 2, 8, 32, 3
    kx, km, kg, kb = jax.random.split(key, 4)
    x = jax.random.normal(kx, (batch, seq, d_model), dtype=jnp.float32)
    mask = (jax.random.uniform(km, (batch, 1, seq)) > 0.2).astype(jnp.float32)

    enc = Encoder(size=d_model, N=n_layers)
    # Non-trivial affine params to exercise gamma/beta handling.
    enc.a_2 = 1.0 + 0.1 * jax.random.normal(kg, (d_model,), dtype=jnp.float32)
    enc.b_2 = 0.1 * jax.random.normal(kb, (d_model,), dtype=jnp.float32)

    out = jax.block_until_ready(enc(x, mask))
    ref = _layernorm_reference(x, enc.a_2, enc.b_2)
    assert out.shape == x.shape
    assert jnp.allclose(out, ref, atol=1e-5, rtol=1e-5), float(
        jnp.max(jnp.abs(out - ref)))

    # Secondary check: wide d_model (row-wise path) + non-divisible row count
    # (exercises the cdiv/padding path).
    b2, s2, d2 = 2, 5, 256
    x_w = jax.random.normal(jax.random.PRNGKey(1), (b2, s2, d2), dtype=jnp.float32)
    g_w = jnp.ones((d2,), jnp.float32)
    b_w = jnp.zeros((d2,), jnp.float32)
    out_w = jax.block_until_ready(layer_norm_pallas(x_w, g_w, b_w))
    ref_w = _layernorm_reference(x_w, g_w, b_w)
    assert out_w.shape == x_w.shape
    assert jnp.allclose(out_w, ref_w, atol=1e-5, rtol=1e-5), float(
        jnp.max(jnp.abs(out_w - ref_w)))

    print("KERNEL_OK")
</pallas_src>

<mosaic_0001>
module attributes {stable_mosaic.version = 11 : i64} {
  func.func @_layernorm_folded_kernel(%arg0: i32, %arg1: memref<8x128xf32, #tpu.memory_space<vmem>>, %arg2: memref<1x128xf32, #tpu.memory_space<vmem>>, %arg3: memref<1x128xf32, #tpu.memory_space<vmem>>, %arg4: memref<8x128xf32, #tpu.memory_space<vmem>>) attributes {dimension_semantics = [#tpu.dimension_semantics<parallel>], iteration_bounds = array<i64: 1>, scalar_prefetch = 0 : i64, scratch_operands = 0 : i64, tpu.core_type = #tpu.core_type<tc>, window_params = [{transform_indices = @transform_0, window_bounds = array<i64: 8, 128>}, {pipeline_mode = #tpu.pipeline_mode<synchronous>, transform_indices = @transform_1, window_bounds = array<i64: 1, 128>}, {pipeline_mode = #tpu.pipeline_mode<synchronous>, transform_indices = @transform_2, window_bounds = array<i64: 1, 128>}, {transform_indices = @transform_3, window_bounds = array<i64: 8, 128>}]} {
    %c0 = arith.constant 0 : index
    %c0_0 = arith.constant 0 : index
    %0 = vector.load %arg1[%c0, %c0_0] : memref<8x128xf32, #tpu.memory_space<vmem>>, vector<8x128xf32>
    %c0_1 = arith.constant 0 : index
    %c0_2 = arith.constant 0 : index
    %1 = vector.load %arg2[%c0_1, %c0_2] : memref<1x128xf32, #tpu.memory_space<vmem>>, vector<1x128xf32>
    %c0_3 = arith.constant 0 : index
    %c0_4 = arith.constant 0 : index
    %2 = vector.load %arg3[%c0_3, %c0_4] : memref<1x128xf32, #tpu.memory_space<vmem>>, vector<1x128xf32>
    %3 = vector.extract_strided_slice %0 {offsets = [0, 0], sizes = [8, 32], strides = [1, 1]} : vector<8x128xf32> to vector<8x32xf32>
    %cst = arith.constant dense<0.000000e+00> : vector<8xf32>
    %4 = vector.multi_reduction <add>, %3, %cst [1] : vector<8x32xf32> to vector<8xf32>
    %5 = vector.shape_cast %4 : vector<8xf32> to vector<8x1xf32>
    %cst_5 = arith.constant 3.200000e+01 : f32
    %6 = vector.broadcast %cst_5 : f32 to vector<8x1xf32>
    %7 = arith.divf %5, %6 : vector<8x1xf32>
    %8 = vector.broadcast %7 : vector<8x1xf32> to vector<8x32xf32>
    %9 = arith.subf %3, %8 : vector<8x32xf32>
    %10 = arith.mulf %9, %9 : vector<8x32xf32>
    %cst_6 = arith.constant dense<0.000000e+00> : vector<8xf32>
    %11 = vector.multi_reduction <add>, %10, %cst_6 [1] : vector<8x32xf32> to vector<8xf32>
    %12 = vector.shape_cast %11 : vector<8xf32> to vector<8x1xf32>
    %cst_7 = arith.constant 0.0322580636 : f32
    %13 = vector.broadcast %cst_7 : f32 to vector<8x1xf32>
    %14 = arith.mulf %12, %13 : vector<8x1xf32>
    %cst_8 = arith.constant 9.99999997E-7 : f32
    %15 = vector.broadcast %cst_8 : f32 to vector<8x1xf32>
    %16 = arith.addf %14, %15 : vector<8x1xf32>
    %17 = math.rsqrt %16 : vector<8x1xf32>
    %18 = vector.broadcast %17 : vector<8x1xf32> to vector<8x32xf32>
    %19 = arith.mulf %9, %18 : vector<8x32xf32>
    %20 = vector.extract_strided_slice %0 {offsets = [0, 32], sizes = [8, 32], strides = [1, 1]} : vector<8x128xf32> to vector<8x32xf32>
    %cst_9 = arith.constant dense<0.000000e+00> : vector<8xf32>
    %21 = vector.multi_reduction <add>, %20, %cst_9 [1] : vector<8x32xf32> to vector<8xf32>
    %22 = vector.shape_cast %21 : vector<8xf32> to vector<8x1xf32>
    %cst_10 = arith.constant 3.200000e+01 : f32
    %23 = vector.broadcast %cst_10 : f32 to vector<8x1xf32>
    %24 = arith.divf %22, %23 : vector<8x1xf32>
    %25 = vector.broadcast %24 : vector<8x1xf32> to vector<8x32xf32>
    %26 = arith.subf %20, %25 : vector<8x32xf32>
    %27 = arith.mulf %26, %26 : vector<8x32xf32>
    %cst_11 = arith.constant dense<0.000000e+00> : vector<8xf32>
    %28 = vector.multi_reduction <add>, %27, %cst_11 [1] : vector<8x32xf32> to vector<8xf32>
    %29 = vector.shape_cast %28 : vector<8xf32> to vector<8x1xf32>
    %cst_12 = arith.constant 0.0322580636 : f32
    %30 = vector.broadcast %cst_12 : f32 to vector<8x1xf32>
    %31 = arith.mulf %29, %30 : vector<8x1xf32>
    %cst_13 = arith.constant 9.99999997E-7 : f32
    %32 = vector.broadcast %cst_13 : f32 to vector<8x1xf32>
    %33 = arith.addf %31, %32 : vector<8x1xf32>
    %34 = math.rsqrt %33 : vector<8x1xf32>
    %35 = vector.broadcast %34 : vector<8x1xf32> to vector<8x32xf32>
    %36 = arith.mulf %26, %35 : vector<8x32xf32>
    %37 = vector.extract_strided_slice %0 {offsets = [0, 64], sizes = [8, 32], strides = [1, 1]} : vector<8x128xf32> to vector<8x32xf32>
    %cst_14 = arith.constant dense<0.000000e+00> : vector<8xf32>
    %38 = vector.multi_reduction <add>, %37, %cst_14 [1] : vector<8x32xf32> to vector<8xf32>
    %39 = vector.shape_cast %38 : vector<8xf32> to vector<8x1xf32>
    %cst_15 = arith.constant 3.200000e+01 : f32
    %40 = vector.broadcast %cst_15 : f32 to vector<8x1xf32>
    %41 = arith.divf %39, %40 : vector<8x1xf32>
    %42 = vector.broadcast %41 : vector<8x1xf32> to vector<8x32xf32>
    %43 = arith.subf %37, %42 : vector<8x32xf32>
    %44 = arith.mulf %43, %43 : vector<8x32xf32>
    %cst_16 = arith.constant dense<0.000000e+00> : vector<8xf32>
    %45 = vector.multi_reduction <add>, %44, %cst_16 [1] : vector<8x32xf32> to vector<8xf32>
    %46 = vector.shape_cast %45 : vector<8xf32> to vector<8x1xf32>
    %cst_17 = arith.constant 0.0322580636 : f32
    %47 = vector.broadcast %cst_17 : f32 to vector<8x1xf32>
    %48 = arith.mulf %46, %47 : vector<8x1xf32>
    %cst_18 = arith.constant 9.99999997E-7 : f32
    %49 = vector.broadcast %cst_18 : f32 to vector<8x1xf32>
    %50 = arith.addf %48, %49 : vector<8x1xf32>
    %51 = math.rsqrt %50 : vector<8x1xf32>
    %52 = vector.broadcast %51 : vector<8x1xf32> to vector<8x32xf32>
    %53 = arith.mulf %43, %52 : vector<8x32xf32>
    %54 = vector.extract_strided_slice %0 {offsets = [0, 96], sizes = [8, 32], strides = [1, 1]} : vector<8x128xf32> to vector<8x32xf32>
    %cst_19 = arith.constant dense<0.000000e+00> : vector<8xf32>
    %55 = vector.multi_reduction <add>, %54, %cst_19 [1] : vector<8x32xf32> to vector<8xf32>
    %56 = vector.shape_cast %55 : vector<8xf32> to vector<8x1xf32>
    %cst_20 = arith.constant 3.200000e+01 : f32
    %57 = vector.broadcast %cst_20 : f32 to vector<8x1xf32>
    %58 = arith.divf %56, %57 : vector<8x1xf32>
    %59 = vector.broadcast %58 : vector<8x1xf32> to vector<8x32xf32>
    %60 = arith.subf %54, %59 : vector<8x32xf32>
    %61 = arith.mulf %60, %60 : vector<8x32xf32>
    %cst_21 = arith.constant dense<0.000000e+00> : vector<8xf32>
    %62 = vector.multi_reduction <add>, %61, %cst_21 [1] : vector<8x32xf32> to vector<8xf32>
    %63 = vector.shape_cast %62 : vector<8xf32> to vector<8x1xf32>
    %cst_22 = arith.constant 0.0322580636 : f32
    %64 = vector.broadcast %cst_22 : f32 to vector<8x1xf32>
    %65 = arith.mulf %63, %64 : vector<8x1xf32>
    %cst_23 = arith.constant 9.99999997E-7 : f32
    %66 = vector.broadcast %cst_23 : f32 to vector<8x1xf32>
    %67 = arith.addf %65, %66 : vector<8x1xf32>
    %68 = math.rsqrt %67 : vector<8x1xf32>
    %69 = vector.broadcast %68 : vector<8x1xf32> to vector<8x32xf32>
    %70 = arith.mulf %60, %69 : vector<8x32xf32>
    %71 = tpu.concatenate %19, %36, %53, %70 in 1 : vector<8x32xf32>, vector<8x32xf32>, vector<8x32xf32>, vector<8x32xf32> -> vector<8x128xf32>
    %72 = vector.broadcast %1 : vector<1x128xf32> to vector<8x128xf32>
    %73 = arith.mulf %71, %72 : vector<8x128xf32>
    %74 = vector.broadcast %2 : vector<1x128xf32> to vector<8x128xf32>
    %75 = arith.addf %73, %74 : vector<8x128xf32>
    %c0_24 = arith.constant 0 : index
    %c0_25 = arith.constant 0 : index
    %76 = vector.load %arg4[%c0_24, %c0_25] : memref<8x128xf32, #tpu.memory_space<vmem>>, vector<8x128xf32>
    tpu.vector_store %arg4[%c0_24, %c0_25], %75 {strides = array<i32>} : memref<8x128xf32, #tpu.memory_space<vmem>>, vector<8x128xf32>,
    return
  }
  func.func @transform_0(%arg0: i32) -> (i32, i32) {
    %c0_i32 = arith.constant 0 : i32
    %c0_i32_0 = arith.constant 0 : i32
    return %arg0, %c0_i32 : i32, i32
  }
  func.func @transform_1(%arg0: i32) -> (i32, i32) {
    %c0_i32 = arith.constant 0 : i32
    %c0_i32_0 = arith.constant 0 : i32
    %c0_i32_1 = arith.constant 0 : i32
    return %c0_i32, %c0_i32_0 : i32, i32
  }
  func.func @transform_2(%arg0: i32) -> (i32, i32) {
    %c0_i32 = arith.constant 0 : i32
    %c0_i32_0 = arith.constant 0 : i32
    %c0_i32_1 = arith.constant 0 : i32
    return %c0_i32, %c0_i32_0 : i32, i32
  }
  func.func @transform_3(%arg0: i32) -> (i32, i32) {
    %c0_i32 = arith.constant 0 : i32
    %c0_i32_0 = arith.constant 0 : i32
    return %arg0, %c0_i32 : i32, i32
  }
}

</mosaic_0001>

<llo_original>
// kernel: tpu_custom_call.1
$region0: #{tpu_custom_call.1}
  #allocation0 [shape = 'u32[]', space=smem, size = 0x4, offset = 0x4, fixed_abs, tag = 'smem constant byte address 0x4 - core index']
  #allocation1 [shape = 'u32[144,128]{1,0:T(1,128)}', space=vmem, size = 0x12000, scoped, tag = 'internal scratch']
  %s0 = inlined_call_operand.hbm [shape: f32[8,128], index: 0, kind: input, shape index: {}]
  %s1 = inlined_call_operand.vmem [shape: f32[1,128], index: 1, kind: input, shape index: {}]
  %s2 = inlined_call_operand.vmem [shape: f32[1,128], index: 2, kind: input, shape index: {}]
  %s3 = inlined_call_operand.hbm [shape: f32[8,128], index: 3, kind: output, shape index: {}]
  %s4 = sld [smem:[#allocation0]]
  $region26: #{tpu_custom_call.1} parent=0
    _
  %s6 = ssub.s32 1, %s4
  %s7 = scalar_select 0, %s6, %s4
  $region1: #{tpu_custom_call.1} parent=0
    #allocation2 [shape = 'u8[4096]{0}', space=vmem, size = 0x1000, scoped, tag = 'input window, operand 0, single buffered']
    #allocation3 [shape = 's32[1]{0}', space=sflag, size = 0x4, scoped, tag = 'scoped memory for tpu_custom_call.1']
    #allocation4 [shape = 's32[1]{0}', space=sflag, size = 0x4, scoped, tag = 'scoped memory for tpu_custom_call.1']
    #allocation5 [shape = 'u8[4096]{0}', space=vmem, size = 0x1000, scoped, tag = 'output window, operand 0, single buffered']
    %8 = vsyncpa [#allocation3], 0
    %9 = vsyncpa [#allocation4], 0
    // Predicated region
    $region2: #{tpu_custom_call.1} parent=1 // pred_check
      _
    $region3: #{tpu_custom_call.1} parent=1 // pred_check_branch
      %11 = sbr.rel (0) target = $region5
    $region4: #{tpu_custom_call.1} parent=1 // pred_region
      %s13 = ssub.s32 128, 128
      %14 = vsyncadd [#allocation3], %s13
      %s16 = sshll.u32 [#allocation2], 4
      %s17 = int_to_ptr.vmem [resolvable:$true] %s16
      %19 = dma.hbm_to_vmem [thread:$0]  %s0, 128, %s17, [#allocation3]
    $region5: #{tpu_custom_call.1} parent=1 // pred_fallthru
      _
    // Predicated region
    $region6: #{tpu_custom_call.1} parent=1 // pred_check
      _
    $region7: #{tpu_custom_call.1} parent=1 // pred_check_branch
      %21 = sbr.rel (0) target = $region9
    $region8: #{tpu_custom_call.1} parent=1 // pred_region
      _
    $region9: #{tpu_custom_call.1} parent=1 // pred_fallthru
      _
    // Predicated region
    $region10: #{tpu_custom_call.1} parent=1 // pred_check
      _
    $region11: #{tpu_custom_call.1} parent=1 // pred_check_branch
      %23 = sbr.rel (0) target = $region13
    $region12: #{tpu_custom_call.1} parent=1 // pred_region
      _
    $region13: #{tpu_custom_call.1} parent=1 // pred_fallthru
      _
    // Predicated region
    $region14: #{tpu_custom_call.1} parent=1 // pred_check
      _
    $region15: #{tpu_custom_call.1} parent=1 // pred_check_branch
      %25 = sbr.rel (0) target = $region17
    $region16: #{tpu_custom_call.1} parent=1 // pred_region
      %26 = dma.done [#allocation3], 128
    $region17: #{tpu_custom_call.1} parent=1 // pred_fallthru
      _
    %v27 = vld [vmem:[#allocation2] sm:$0xff]
    %v28 = vld [vmem:[%s1] sm:$0x1]
    %v29 = vld [vmem:[%s2] sm:$0x1]
    %vm30 = vcmask 261120
    %v31 = vsel %vm30, %v27, 0.0
    %32 = vadd.xlane.f32.xlu0 %v31
    %v33 = vpop.xlane.xlu0 %32
    %v34 = vrcp.pop 32.0
    %v35 = vmul.f32 %v33, %v34
    %v36 = vsub.f32 %v27, %v35
    %v37 = vmul.f32 %v36, %v36
    %v38 = vsel %vm30, %v37, 0.0
    %39 = vadd.xlane.f32.xlu0 %v38
    %v40 = vpop.xlane.xlu0 %39
    %v41 = vmul.f32 %v40, 0.032258064
    %v42 = vadd.f32 %v41, 1e-06
    %v43 = vrsqrt.pop %v42
    %v44 = vmul.f32 %v36, %v43
    %46 = vrot.lane.b32.xlu0 %v27, 96
    %v47 = vpop.permute.xlu0 %46
    %v49 = vsel %vm30, %v47, 0.0
    %50 = vadd.xlane.f32.xlu0 %v49
    %v51 = vpop.xlane.xlu0 %50
    %v52 = vmul.f32 %v51, %v34
    %v53 = vsub.f32 %v27, %v52
    %v54 = vmul.f32 %v53, %v53
    %56 = vrot.lane.b32.xlu0 %v54, 96
    %v57 = vpop.permute.xlu0 %56
    %v59 = vsel %vm30, %v57, 0.0
    %60 = vadd.xlane.f32.xlu0 %v59
    %v61 = vpop.xlane.xlu0 %60
    %v62 = vmul.f32 %v61, 0.032258064
    %v63 = vadd.f32 %v62, 1e-06
    %v64 = vrsqrt.pop %v63
    %v65 = vmul.f32 %v53, %v64
    %66 = vrot.lane.b32.xlu0 %v27, 64
    %v67 = vpop.permute.xlu0 %66
    %v69 = vsel %vm30, %v67, 0.0
    %70 = vadd.xlane.f32.xlu0 %v69
    %v71 = vpop.xlane.xlu0 %70
    %v72 = vmul.f32 %v71, %v34
    %v73 = vsub.f32 %v27, %v72
    %v74 = vmul.f32 %v73, %v73
    %76 = vrot.lane.b32.xlu0 %v74, 64
    %v77 = vpop.permute.xlu0 %76
    %v79 = vsel %vm30, %v77, 0.0
    %80 = vadd.xlane.f32.xlu0 %v79
    %v81 = vpop.xlane.xlu0 %80
    %v82 = vmul.f32 %v81, 0.032258064
    %v83 = vadd.f32 %v82, 1e-06
    %v84 = vrsqrt.pop %v83
    %v85 = vmul.f32 %v73, %v84
    %86 = vrot.lane.b32.xlu0 %v27, 32
    %v87 = vpop.permute.xlu0 %86
    %v89 = vsel %vm30, %v87, 0.0
    %90 = vadd.xlane.f32.xlu0 %v89
    %v91 = vpop.xlane.xlu0 %90
    %v92 = vmul.f32 %v91, %v34
    %v93 = vsub.f32 %v27, %v92
    %v94 = vmul.f32 %v93, %v93
    %96 = vrot.lane.b32.xlu0 %v94, 32
    %v97 = vpop.permute.xlu0 %96
    %v99 = vsel %vm30, %v97, 0.0
    %100 = vadd.xlane.f32.xlu0 %v99
    %v101 = vpop.xlane.xlu0 %100
    %v102 = vmul.f32 %v101, 0.032258064
    %v103 = vadd.f32 %v102, 1e-06
    %v104 = vrsqrt.pop %v103
    %v105 = vmul.f32 %v93, %v104
    %v106 = vsel %vm30, %v44, %v65
    %vm107 = vcmask 523264
    %v108 = vsel %vm107, %v106, %v85
    %vm109 = vcmask 785408
    %v110 = vsel %vm109, %v108, %v105
    %v112 = vlaneseq
    %v113 = vshrl.u32 %v112, 7
    %v114 = vsub.s32 0, %v113
    %v115 = vrot.slane %v28, %v114
    %v117 = vmul.f32 %v110, %v115
    %v119 = vlaneseq
    %v120 = vshrl.u32 %v119, 7
    %v121 = vsub.s32 0, %v120
    %v122 = vrot.slane %v29, %v121
    %v124 = vadd.f32 %v117, %v122
    %125 = vst [vmem:[#allocation5] sm:$0xff] %v124
    // Predicated region
    $region18: #{tpu_custom_call.1} parent=1 // pred_check
      _
    $region19: #{tpu_custom_call.1} parent=1 // pred_check_branch
      %127 = sbr.rel (0) target = $region21
    $region20: #{tpu_custom_call.1} parent=1 // pred_region
      %s129 = ssub.s32 128, 128
      %130 = vsyncadd [#allocation4], %s129
      %s132 = sshll.u32 [#allocation5], 4
      %s133 = int_to_ptr.vmem [resolvable:$true] %s132
      %135 = dma.vmem_to_hbm [thread:$0]  %s133, 128, %s3, [#allocation4]
    $region21: #{tpu_custom_call.1} parent=1 // pred_fallthru
      _
    // Predicated region
    $region22: #{tpu_custom_call.1} parent=1 // pred_check
      _
    $region23: #{tpu_custom_call.1} parent=1 // pred_check_branch
      %137 = sbr.rel (0) target = $region25
    $region24: #{tpu_custom_call.1} parent=1 // pred_region
      %138 = dma.done [#allocation4], 128
    $region25: #{tpu_custom_call.1} parent=1 // pred_fallthru
      _
    %139 = vsyncpa [#allocation3], 1
    %140 = vsyncpa [#allocation4], 1

</llo_original>
